<compile_context>
chip_gen: v5e
topology: v5e:2x2
jax: 0.10.0
libtpu: 0.0.40
codegen_flags: <defaults>
</compile_context>

<pallas_src>
import functools

import jax
import jax.numpy as jnp
from jax.experimental import pallas as pl
from jax.experimental.pallas import tpu as pltpu

_LANE = 128


def _round_up(n, m):
    return ((n + m - 1) // m) * m


def mlp_kernel(x_ref, w1_ref, pvec_ref, w2_ref, o_ref, *, hidden_true: int):
    # --- Linear 1: [tb, in_dim] @ [in_dim, hid_p] (bf16 operands, f32 acc) ---
    x = x_ref[...].astype(jnp.bfloat16)
    h = jnp.dot(x, w1_ref[...], preferred_element_type=jnp.float32)

    hid_p = h.shape[-1]
    out_dim = o_ref.shape[-1]
    pv = pvec_ref[...]                        # (4, P) f32: b1 / gamma / beta / b2
    b1 = pv[0:1, :hid_p]
    gamma = pv[1:2, :hid_p]
    beta = pv[2:3, :hid_p]
    b2 = pv[3:4, :out_dim]

    h = h + b1                                # padded lanes stay exactly 0

    # --- LayerNorm over the true hidden width (padded lanes are 0 -> no mask) ---
    inv_n = 1.0 / float(hidden_true)
    mean = jnp.sum(h, axis=-1, keepdims=True) * inv_n
    e_x2 = jnp.sum(h * h, axis=-1, keepdims=True) * inv_n
    var = e_x2 - mean * mean
    h = (h - mean) * jax.lax.rsqrt(var + 1e-5)   # eps = PyTorch LayerNorm default
    h = h * gamma + beta                      # zero-padded gamma/beta re-zero padded lanes

    # --- ReLU ---
    h = jnp.maximum(h, 0.0)

    # --- Linear 2: [tb, hid_p] @ [hid_p, out_dim] (bf16 operands, f32 acc) ---
    out = jnp.dot(h.astype(jnp.bfloat16), w2_ref[...],
                  preferred_element_type=jnp.float32)
    o_ref[...] = (out + b2).astype(o_ref.dtype)


def prepare_params(w1, b1, gamma, beta, w2, b2):
    """One-time param prep (hoisted out of the forward call).

    Pads the hidden dim to 128 lanes (zero-padded so padded lanes are inert),
    casts MXU operands to bf16, and packs the four small vectors into a single
    (4, P) f32 operand. Returns (w1p, packed, w2p, hidden_true).
    """
    f32, bf16 = jnp.float32, jnp.bfloat16
    in_dim, hidden = w1.shape
    hidden_w, out_dim = w2.shape
    assert hidden == hidden_w
    hid_p = _round_up(hidden, _LANE)
    P = max(hid_p, _round_up(out_dim, _LANE))

    w1p = jnp.zeros((in_dim, hid_p), bf16).at[:, :hidden].set(w1.astype(bf16))
    w2p = jnp.zeros((hid_p, out_dim), bf16).at[:hidden, :].set(w2.astype(bf16))

    packed = jnp.zeros((4, P), f32)
    packed = packed.at[0, :hidden].set(b1.reshape(-1).astype(f32))
    packed = packed.at[1, :hidden].set(gamma.reshape(-1).astype(f32))
    packed = packed.at[2, :hidden].set(beta.reshape(-1).astype(f32))
    packed = packed.at[3, :out_dim].set(b2.reshape(-1).astype(f32))
    return w1p, packed, w2p, hidden


def mlp_forward(x, w1p, packed, w2p, hidden_true, *, block_b=256):
    """x: [B, in_dim] float32 (unpadded). Params from prepare_params()."""
    B, in_dim = x.shape
    in_dim_w, hid_p = w1p.shape
    hid_p2, out_dim = w2p.shape
    assert in_dim == in_dim_w and hid_p == hid_p2
    P = packed.shape[1]

    block_b = min(block_b, _round_up(B, 8))
    b_p = _round_up(B, block_b)
    xp = x if b_p == B else jnp.zeros((b_p, in_dim), x.dtype).at[:B].set(x)

    grid = (b_p // block_b,)
    kernel = functools.partial(mlp_kernel, hidden_true=hidden_true)

    flops = 2 * b_p * (in_dim * hidden_true + hidden_true * out_dim)
    bytes_accessed = (xp.size * xp.dtype.itemsize
                      + w1p.size * 2 + w2p.size * 2 + packed.size * 4
                      + b_p * out_dim * x.dtype.itemsize)

    out = pl.pallas_call(
        kernel,
        out_shape=jax.ShapeDtypeStruct((b_p, out_dim), x.dtype),
        grid_spec=pl.GridSpec(
            grid=grid,
            in_specs=[
                pl.BlockSpec((block_b, in_dim), lambda i: (i, 0)),   # x tile (unpadded K)
                pl.BlockSpec((in_dim, hid_p), lambda i: (0, 0)),     # W1 (grid-invariant)
                pl.BlockSpec((4, P), lambda i: (0, 0)),              # b1/gamma/beta/b2 packed
                pl.BlockSpec((hid_p, out_dim), lambda i: (0, 0)),    # W2 (grid-invariant)
            ],
            out_specs=pl.BlockSpec((block_b, out_dim), lambda i: (i, 0)),  # unpadded output
        ),
        compiler_params=pltpu.CompilerParams(
            dimension_semantics=("parallel",),   # batch axis; shards across TCs if grid > 1
        ),
        cost_estimate=pl.CostEstimate(
            flops=flops, transcendentals=b_p, bytes_accessed=bytes_accessed),
    )(xp, w1p, packed, w2p)

    return out if b_p == B else out[:B]


def init_params(key, in_dim, hidden_dim, out_dim):
    """Deterministic init mimicking nn.Linear (uniform +/- 1/sqrt(fan_in)) and
    nn.LayerNorm (gamma=1, beta=0). Weights stored as [in, out], float32."""
    k1, k2, k3, k4 = jax.random.split(key, 4)
    lim1 = 1.0 / jnp.sqrt(in_dim)
    lim2 = 1.0 / jnp.sqrt(hidden_dim)
    w1 = jax.random.uniform(k1, (in_dim, hidden_dim), jnp.float32, -lim1, lim1)
    b1 = jax.random.uniform(k2, (1, hidden_dim), jnp.float32, -lim1, lim1)
    w2 = jax.random.uniform(k3, (hidden_dim, out_dim), jnp.float32, -lim2, lim2)
    b2 = jax.random.uniform(k4, (1, out_dim), jnp.float32, -lim2, lim2)
    gamma = jnp.ones((1, hidden_dim), jnp.float32)
    beta = jnp.zeros((1, hidden_dim), jnp.float32)
    return w1, b1, gamma, beta, w2, b2


def mlp_reference(x, w1, b1, gamma, beta, w2, b2):
    h = x @ w1 + b1
    mean = jnp.mean(h, axis=-1, keepdims=True)
    var = jnp.mean((h - mean) ** 2, axis=-1, keepdims=True)
    h = (h - mean) * jax.lax.rsqrt(var + 1e-5)
    h = h * gamma + beta
    h = jnp.maximum(h, 0.0)
    return h @ w2 + b2


if __name__ == "__main__":
    # MLP(in_dim=16, out_dim=8, hidden_dim=32, num_layer=2, norm=True,
    #     act_fn='relu', act_last=False)  ->  Linear -> LayerNorm -> ReLU -> Linear
    B, in_dim, hidden_dim, out_dim = 256, 16, 32, 8

    key = jax.random.PRNGKey(0)
    kx, kp = jax.random.split(key)
    x = jax.random.normal(kx, (B, in_dim), jnp.float32)
    raw_params = init_params(kp, in_dim, hidden_dim, out_dim)

    # Param prep is done once (padding / bf16 cast / packing hoisted out of forward).
    w1p, packed, w2p, hidden_true = prepare_params(*raw_params)
    w1p, packed, w2p = jax.block_until_ready((w1p, packed, w2p))

    out = mlp_forward(x, w1p, packed, w2p, hidden_true, block_b=256)  # grid=(1,)
    out = jax.block_until_ready(out)

    ref = mlp_reference(x, *raw_params)
    assert out.shape == (B, out_dim)
    # bf16 MXU operands (f32 accumulation) + one-pass LN variance vs. pure-f32 reference.
    assert jnp.allclose(out, ref, atol=5e-2, rtol=5e-2)

    print("KERNEL_OK")
</pallas_src>

<mosaic_0001>
module attributes {stable_mosaic.version = 11 : i64} {
  func.func @mlp_kernel(%arg0: i32, %arg1: memref<256x16xf32, #tpu.memory_space<vmem>>, %arg2: memref<16x128xbf16, #tpu.memory_space<vmem>>, %arg3: memref<4x128xf32, #tpu.memory_space<vmem>>, %arg4: memref<128x8xbf16, #tpu.memory_space<vmem>>, %arg5: memref<256x8xf32, #tpu.memory_space<vmem>>) attributes {dimension_semantics = [#tpu.dimension_semantics<parallel>], iteration_bounds = array<i64: 1>, scalar_prefetch = 0 : i64, scratch_operands = 0 : i64, tpu.core_type = #tpu.core_type<tc>, window_params = [{transform_indices = @transform_0, window_bounds = array<i64: 256, 16>}, {pipeline_mode = #tpu.pipeline_mode<synchronous>, transform_indices = @transform_1, window_bounds = array<i64: 16, 128>}, {pipeline_mode = #tpu.pipeline_mode<synchronous>, transform_indices = @transform_2, window_bounds = array<i64: 4, 128>}, {pipeline_mode = #tpu.pipeline_mode<synchronous>, transform_indices = @transform_3, window_bounds = array<i64: 128, 8>}, {transform_indices = @transform_4, window_bounds = array<i64: 256, 8>}]} {
    %c0 = arith.constant 0 : index
    %c0_0 = arith.constant 0 : index
    %0 = vector.load %arg1[%c0, %c0_0] : memref<256x16xf32, #tpu.memory_space<vmem>>, vector<256x16xf32>
    %1 = arith.truncf %0 : vector<256x16xf32> to vector<256x16xbf16>
    %c0_1 = arith.constant 0 : index
    %c0_2 = arith.constant 0 : index
    %2 = vector.load %arg2[%c0_1, %c0_2] : memref<16x128xbf16, #tpu.memory_space<vmem>>, vector<16x128xbf16>
    %cst = arith.constant dense<0.000000e+00> : vector<256x128xf32>
    %3 = tpu.matmul %1, %2, %cst {dimension_numbers = #tpu.dot_dimension_numbers<[1], [0], [0], [1], [0, 0, 1, 1], [], []>} : vector<256x16xbf16>, vector<16x128xbf16>, vector<256x128xf32> -> vector<256x128xf32>
    %c0_3 = arith.constant 0 : index
    %c0_4 = arith.constant 0 : index
    %4 = vector.load %arg3[%c0_3, %c0_4] : memref<4x128xf32, #tpu.memory_space<vmem>>, vector<4x128xf32>
    %5 = vector.extract_strided_slice %4 {offsets = [0, 0], sizes = [1, 128], strides = [1, 1]} : vector<4x128xf32> to vector<1x128xf32>
    %6 = vector.extract_strided_slice %4 {offsets = [1, 0], sizes = [1, 128], strides = [1, 1]} : vector<4x128xf32> to vector<1x128xf32>
    %7 = vector.extract_strided_slice %4 {offsets = [2, 0], sizes = [1, 128], strides = [1, 1]} : vector<4x128xf32> to vector<1x128xf32>
    %8 = vector.extract_strided_slice %4 {offsets = [3, 0], sizes = [1, 8], strides = [1, 1]} : vector<4x128xf32> to vector<1x8xf32>
    %9 = vector.broadcast %5 : vector<1x128xf32> to vector<256x128xf32>
    %10 = arith.addf %3, %9 : vector<256x128xf32>
    %cst_5 = arith.constant dense<0.000000e+00> : vector<256xf32>
    %11 = vector.multi_reduction <add>, %10, %cst_5 [1] : vector<256x128xf32> to vector<256xf32>
    %12 = vector.shape_cast %11 : vector<256xf32> to vector<256x1xf32>
    %cst_6 = arith.constant 3.125000e-02 : f32
    %13 = vector.broadcast %cst_6 : f32 to vector<256x1xf32>
    %14 = arith.mulf %12, %13 : vector<256x1xf32>
    %15 = arith.mulf %10, %10 : vector<256x128xf32>
    %cst_7 = arith.constant dense<0.000000e+00> : vector<256xf32>
    %16 = vector.multi_reduction <add>, %15, %cst_7 [1] : vector<256x128xf32> to vector<256xf32>
    %17 = vector.shape_cast %16 : vector<256xf32> to vector<256x1xf32>
    %cst_8 = arith.constant 3.125000e-02 : f32
    %18 = vector.broadcast %cst_8 : f32 to vector<256x1xf32>
    %19 = arith.mulf %17, %18 : vector<256x1xf32>
    %20 = arith.mulf %14, %14 : vector<256x1xf32>
    %21 = arith.subf %19, %20 : vector<256x1xf32>
    %22 = vector.broadcast %14 : vector<256x1xf32> to vector<256x128xf32>
    %23 = arith.subf %10, %22 : vector<256x128xf32>
    %cst_9 = arith.constant 9.99999974E-6 : f32
    %24 = vector.broadcast %cst_9 : f32 to vector<256x1xf32>
    %25 = arith.addf %21, %24 : vector<256x1xf32>
    %26 = math.rsqrt %25 : vector<256x1xf32>
    %27 = vector.broadcast %26 : vector<256x1xf32> to vector<256x128xf32>
    %28 = arith.mulf %23, %27 : vector<256x128xf32>
    %29 = vector.broadcast %6 : vector<1x128xf32> to vector<256x128xf32>
    %30 = arith.mulf %28, %29 : vector<256x128xf32>
    %31 = vector.broadcast %7 : vector<1x128xf32> to vector<256x128xf32>
    %32 = arith.addf %30, %31 : vector<256x128xf32>
    %cst_10 = arith.constant 0.000000e+00 : f32
    %33 = vector.broadcast %cst_10 : f32 to vector<256x128xf32>
    %34 = arith.maximumf %32, %33 : vector<256x128xf32>
    %35 = arith.truncf %34 : vector<256x128xf32> to vector<256x128xbf16>
    %c0_11 = arith.constant 0 : index
    %c0_12 = arith.constant 0 : index
    %36 = vector.load %arg4[%c0_11, %c0_12] : memref<128x8xbf16, #tpu.memory_space<vmem>>, vector<128x8xbf16>
    %cst_13 = arith.constant dense<0.000000e+00> : vector<256x8xf32>
    %37 = tpu.matmul %35, %36, %cst_13 {dimension_numbers = #tpu.dot_dimension_numbers<[1], [0], [0], [1], [0, 0, 1, 1], [], []>} : vector<256x128xbf16>, vector<128x8xbf16>, vector<256x8xf32> -> vector<256x8xf32>
    %38 = vector.broadcast %8 : vector<1x8xf32> to vector<256x8xf32>
    %39 = arith.addf %37, %38 : vector<256x8xf32>
    %c0_14 = arith.constant 0 : index
    %c0_15 = arith.constant 0 : index
    %40 = vector.load %arg5[%c0_14, %c0_15] : memref<256x8xf32, #tpu.memory_space<vmem>>, vector<256x8xf32>
    tpu.vector_store %arg5[%c0_14, %c0_15], %39 {strides = array<i32>} : memref<256x8xf32, #tpu.memory_space<vmem>>, vector<256x8xf32>,
    return
  }
  func.func @transform_0(%arg0: i32) -> (i32, i32) {
    %c0_i32 = arith.constant 0 : i32
    %c0_i32_0 = arith.constant 0 : i32
    return %arg0, %c0_i32 : i32, i32
  }
  func.func @transform_1(%arg0: i32) -> (i32, i32) {
    %c0_i32 = arith.constant 0 : i32
    %c0_i32_0 = arith.constant 0 : i32
    %c0_i32_1 = arith.constant 0 : i32
    return %c0_i32, %c0_i32_0 : i32, i32
  }
  func.func @transform_2(%arg0: i32) -> (i32, i32) {
    %c0_i32 = arith.constant 0 : i32
    %c0_i32_0 = arith.constant 0 : i32
    %c0_i32_1 = arith.constant 0 : i32
    return %c0_i32, %c0_i32_0 : i32, i32
  }
  func.func @transform_3(%arg0: i32) -> (i32, i32) {
    %c0_i32 = arith.constant 0 : i32
    %c0_i32_0 = arith.constant 0 : i32
    %c0_i32_1 = arith.constant 0 : i32
    return %c0_i32, %c0_i32_0 : i32, i32
  }
  func.func @transform_4(%arg0: i32) -> (i32, i32) {
    %c0_i32 = arith.constant 0 : i32
    %c0_i32_0 = arith.constant 0 : i32
    return %arg0, %c0_i32 : i32, i32
  }
}

</mosaic_0001>

<llo_original>
// kernel: tpu_custom_call.1
$region0: #{tpu_custom_call.1}
  #allocation0 [shape = 'u32[]', space=smem, size = 0x4, offset = 0x4, fixed_abs, tag = 'smem constant byte address 0x4 - core index']
  #allocation1 [shape = 'u32[72,128]{1,0:T(1,128)}', space=vmem, size = 0x9000, scoped, tag = 'internal scratch']
  %s0 = inlined_call_operand.vmem [shape: f32[256,16], index: 0, kind: input, shape index: {}]
  %s1 = inlined_call_operand.vmem [shape: bf16[16,128], index: 1, kind: input, shape index: {}]
  %s2 = inlined_call_operand.vmem [shape: f32[4,128], index: 2, kind: input, shape index: {}]
  %s3 = inlined_call_operand.vmem [shape: bf16[128,8], index: 3, kind: input, shape index: {}]
  %s4 = inlined_call_operand.vmem [shape: f32[256,8], index: 4, kind: output, shape index: {}]
  %s5 = sld [smem:[#allocation0]]
  $region26: #{tpu_custom_call.1} parent=0
    _
  %s7 = ssub.s32 1, %s5
  %s8 = scalar_select 0, %s7, %s5
  // Predicated region
  $region2: #{tpu_custom_call.1} parent=0 // pred_check
    _
  $region3: #{tpu_custom_call.1} parent=0 // pred_check_branch
    %10 = sbr.rel (0) target = $region5
  $region4: #{tpu_custom_call.1} parent=0 // pred_region
    _
  $region5: #{tpu_custom_call.1} parent=0 // pred_fallthru
    _
  // Predicated region
  $region6: #{tpu_custom_call.1} parent=0 // pred_check
    _
  $region7: #{tpu_custom_call.1} parent=0 // pred_check_branch
    %12 = sbr.rel (0) target = $region9
  $region8: #{tpu_custom_call.1} parent=0 // pred_region
    _
  $region9: #{tpu_custom_call.1} parent=0 // pred_fallthru
    _
  // Predicated region
  $region10: #{tpu_custom_call.1} parent=0 // pred_check
    _
  $region11: #{tpu_custom_call.1} parent=0 // pred_check_branch
    %14 = sbr.rel (0) target = $region13
  $region12: #{tpu_custom_call.1} parent=0 // pred_region
    _
  $region13: #{tpu_custom_call.1} parent=0 // pred_fallthru
    _
  // Predicated region
  $region14: #{tpu_custom_call.1} parent=0 // pred_check
    _
  $region15: #{tpu_custom_call.1} parent=0 // pred_check_branch
    %16 = sbr.rel (0) target = $region17
  $region16: #{tpu_custom_call.1} parent=0 // pred_region
    _
  $region17: #{tpu_custom_call.1} parent=0 // pred_fallthru
    _
  %v18 = vld [vmem:[%s0] sm:$0xff]
  %v19 = vld [vmem:[%s0 + $0x8] sm:$0xff]
  %v20 = vld [vmem:[%s0 + $0x10] sm:$0xff]
  %v21 = vld [vmem:[%s0 + $0x18] sm:$0xff]
  %v22 = vld [vmem:[%s0 + $0x20] sm:$0xff]
  %v23 = vld [vmem:[%s0 + $0x28] sm:$0xff]
  %v24 = vld [vmem:[%s0 + $0x30] sm:$0xff]
  %v25 = vld [vmem:[%s0 + $0x38] sm:$0xff]
  %v26 = vld [vmem:[%s0 + $0x40] sm:$0xff]
  %v27 = vld [vmem:[%s0 + $0x48] sm:$0xff]
  %v28 = vld [vmem:[%s0 + $0x50] sm:$0xff]
  %v29 = vld [vmem:[%s0 + $0x58] sm:$0xff]
  %v30 = vld [vmem:[%s0 + $0x60] sm:$0xff]
  %v31 = vld [vmem:[%s0 + $0x68] sm:$0xff]
  %v32 = vld [vmem:[%s0 + $0x70] sm:$0xff]
  %v33 = vld [vmem:[%s0 + $0x78] sm:$0xff]
  %v34 = vld [vmem:[%s0 + $0x80] sm:$0xff]
  %v35 = vld [vmem:[%s0 + $0x88] sm:$0xff]
  %v36 = vld [vmem:[%s0 + $0x90] sm:$0xff]
  %v37 = vld [vmem:[%s0 + $0x98] sm:$0xff]
  %v38 = vld [vmem:[%s0 + $0xa0] sm:$0xff]
  %v39 = vld [vmem:[%s0 + $0xa8] sm:$0xff]
  %v40 = vld [vmem:[%s0 + $0xb0] sm:$0xff]
  %v41 = vld [vmem:[%s0 + $0xb8] sm:$0xff]
  %v42 = vld [vmem:[%s0 + $0xc0] sm:$0xff]
  %v43 = vld [vmem:[%s0 + $0xc8] sm:$0xff]
  %v44 = vld [vmem:[%s0 + $0xd0] sm:$0xff]
  %v45 = vld [vmem:[%s0 + $0xd8] sm:$0xff]
  %v46 = vld [vmem:[%s0 + $0xe0] sm:$0xff]
  %v47 = vld [vmem:[%s0 + $0xe8] sm:$0xff]
  %v48 = vld [vmem:[%s0 + $0xf0] sm:$0xff]
  %v49 = vld [vmem:[%s0 + $0xf8] sm:$0xff]
  %v50 = vpack.c.bf16 %v19, %v18
  %v51 = vpack.c.bf16 %v21, %v20
  %v52 = vpack.c.bf16 %v23, %v22
  %v53 = vpack.c.bf16 %v25, %v24
  %v54 = vpack.c.bf16 %v27, %v26
  %v55 = vpack.c.bf16 %v29, %v28
  %v56 = vpack.c.bf16 %v31, %v30
  %v57 = vpack.c.bf16 %v33, %v32
  %v58 = vpack.c.bf16 %v35, %v34
  %v59 = vpack.c.bf16 %v37, %v36
  %v60 = vpack.c.bf16 %v39, %v38
  %v61 = vpack.c.bf16 %v41, %v40
  %v62 = vpack.c.bf16 %v43, %v42
  %v63 = vpack.c.bf16 %v45, %v44
  %v64 = vpack.c.bf16 %v47, %v46
  %v65 = vpack.c.bf16 %v49, %v48
  %v66 = vld [vmem:[%s1] sm:$0xf]
  %v67 = vld [vmem:[%s1 + $0x4] sm:$0xf]
  %v68 = vld [vmem:[%s2] sm:$0xf]
  %v69 = vperm.slane %v68, 0
  %v72 = vunpack.c.l.b16 %v66
  %v73 = vunpack.c.l.b16 %v67
  %v74 = vpack.c.b16 %v73, %v72
  %vm76 = vcmask 130048
  %v78 = vsel %vm76, %v50, 0
  %v81 = vsel %vm76, %v51, 0
  %v84 = vsel %vm76, %v52, 0
  %v87 = vsel %vm76, %v53, 0
  %v90 = vsel %vm76, %v54, 0
  %v93 = vsel %vm76, %v55, 0
  %v96 = vsel %vm76, %v56, 0
  %v99 = vsel %vm76, %v57, 0
  %v102 = vsel %vm76, %v58, 0
  %v105 = vsel %vm76, %v59, 0
  %v108 = vsel %vm76, %v60, 0
  %v111 = vsel %vm76, %v61, 0
  %v114 = vsel %vm76, %v62, 0
  %v117 = vsel %vm76, %v63, 0
  %v120 = vsel %vm76, %v64, 0
  %v123 = vsel %vm76, %v65, 0
  %125 = vmatpush.bf16.msra.mxu0 0
  %126 = vmatpush.bf16.msra.mxu0 0
  %127 = vmatpush.bf16.msra.mxu0 0
  %128 = vmatpush.bf16.msra.mxu0 0
  %129 = vmatpush.bf16.msra.mxu0 0
  %130 = vmatpush.bf16.msra.mxu0 0
  %131 = vmatpush.bf16.msra.mxu0 0
  %132 = vmatpush.bf16.msra.mxu0 %v74
  %133 = vmatmul.bf16.gmra.mxu0 %v78
  %v134 = vpop.f32.mrf.mxu0
  %v135 = vadd.f32 %v69, %v134
  %v136 = vpop.f32.mrf.mxu0
  %v137 = vadd.f32 %v69, %v136
  %138 = vmatmul.bf16.gmra.mxu0 %v81
  %v139 = vpop.f32.mrf.mxu0
  %v140 = vadd.f32 %v69, %v139
  %v141 = vpop.f32.mrf.mxu0
  %v142 = vadd.f32 %v69, %v141
  %143 = vmatmul.bf16.gmra.mxu0 %v84
  %v144 = vpop.f32.mrf.mxu0
  %v145 = vadd.f32 %v69, %v144
  %v146 = vpop.f32.mrf.mxu0
  %v147 = vadd.f32 %v69, %v146
  %148 = vmatmul.bf16.gmra.mxu0 %v87
  %v149 = vpop.f32.mrf.mxu0
  %v150 = vadd.f32 %v69, %v149
  %v151 = vpop.f32.mrf.mxu0
  %v152 = vadd.f32 %v69, %v151
  %153 = vmatmul.bf16.gmra.mxu0 %v90
  %v154 = vpop.f32.mrf.mxu0
  %v155 = vadd.f32 %v69, %v154
  %v156 = vpop.f32.mrf.mxu0
  %v157 = vadd.f32 %v69, %v156
  %158 = vmatmul.bf16.gmra.mxu0 %v93
  %v159 = vpop.f32.mrf.mxu0
  %v160 = vadd.f32 %v69, %v159
  %v161 = vpop.f32.mrf.mxu0
  %v162 = vadd.f32 %v69, %v161
  %163 = vmatmul.bf16.gmra.mxu0 %v96
  %v164 = vpop.f32.mrf.mxu0
  %v165 = vadd.f32 %v69, %v164
  %v166 = vpop.f32.mrf.mxu0
  %v167 = vadd.f32 %v69, %v166
  %168 = vmatmul.bf16.gmra.mxu0 %v99
  %v169 = vpop.f32.mrf.mxu0
  %v170 = vadd.f32 %v69, %v169
  %v171 = vpop.f32.mrf.mxu0
  %v172 = vadd.f32 %v69, %v171
  %173 = vmatmul.bf16.gmra.mxu0 %v102
  %v174 = vpop.f32.mrf.mxu0
  %v175 = vadd.f32 %v69, %v174
  %v176 = vpop.f32.mrf.mxu0
  %v177 = vadd.f32 %v69, %v176
  %178 = vmatmul.bf16.gmra.mxu0 %v105
  %v179 = vpop.f32.mrf.mxu0
  %v180 = vadd.f32 %v69, %v179
  %v181 = vpop.f32.mrf.mxu0
  %v182 = vadd.f32 %v69, %v181
  %183 = vmatmul.bf16.gmra.mxu0 %v108
  %v184 = vpop.f32.mrf.mxu0
  %v185 = vadd.f32 %v69, %v184
  %v186 = vpop.f32.mrf.mxu0
  %v187 = vadd.f32 %v69, %v186
  %188 = vmatmul.bf16.gmra.mxu0 %v111
  %v189 = vpop.f32.mrf.mxu0
  %v190 = vadd.f32 %v69, %v189
  %v191 = vpop.f32.mrf.mxu0
  %v192 = vadd.f32 %v69, %v191
  %193 = vmatmul.bf16.gmra.mxu0 %v114
  %v194 = vpop.f32.mrf.mxu0
  %v195 = vadd.f32 %v69, %v194
  %v196 = vpop.f32.mrf.mxu0
  %v197 = vadd.f32 %v69, %v196
  %198 = vmatmul.bf16.gmra.mxu0 %v117
  %v199 = vpop.f32.mrf.mxu0
  %v200 = vadd.f32 %v69, %v199
  %v201 = vpop.f32.mrf.mxu0
  %v202 = vadd.f32 %v69, %v201
  %203 = vmatmul.bf16.gmra.mxu0 %v120
  %v204 = vpop.f32.mrf.mxu0
  %v205 = vadd.f32 %v69, %v204
  %v206 = vpop.f32.mrf.mxu0
  %v207 = vadd.f32 %v69, %v206
  %208 = vmatmul.bf16.gmra.mxu0 %v123
  %v209 = vpop.f32.mrf.mxu0
  %v210 = vadd.f32 %v69, %v209
  %v211 = vpop.f32.mrf.mxu0
  %v212 = vadd.f32 %v69, %v211
  %213 = vdwg.mxu0
  %214 = vadd.xlane.f32.xlu0 %v135
  %v215 = vpop.xlane.xlu0 %214
  %216 = vadd.xlane.f32.xlu0 %v137
  %v217 = vpop.xlane.xlu0 %216
  %218 = vadd.xlane.f32.xlu0 %v140
  %v219 = vpop.xlane.xlu0 %218
  %220 = vadd.xlane.f32.xlu0 %v142
  %v221 = vpop.xlane.xlu0 %220
  %222 = vadd.xlane.f32.xlu0 %v145
  %v223 = vpop.xlane.xlu0 %222
  %224 = vadd.xlane.f32.xlu0 %v147
  %v225 = vpop.xlane.xlu0 %224
  %226 = vadd.xlane.f32.xlu0 %v150
  %v227 = vpop.xlane.xlu0 %226
  %228 = vadd.xlane.f32.xlu0 %v152
  %v229 = vpop.xlane.xlu0 %228
  %230 = vadd.xlane.f32.xlu0 %v155
  %v231 = vpop.xlane.xlu0 %230
  %232 = vadd.xlane.f32.xlu0 %v157
  %v233 = vpop.xlane.xlu0 %232
  %234 = vadd.xlane.f32.xlu0 %v160
  %v235 = vpop.xlane.xlu0 %234
  %236 = vadd.xlane.f32.xlu0 %v162
  %v237 = vpop.xlane.xlu0 %236
  %238 = vadd.xlane.f32.xlu0 %v165
  %v239 = vpop.xlane.xlu0 %238
  %240 = vadd.xlane.f32.xlu0 %v167
  %v241 = vpop.xlane.xlu0 %240
  %242 = vadd.xlane.f32.xlu0 %v170
  %v243 = vpop.xlane.xlu0 %242
  %244 = vadd.xlane.f32.xlu0 %v172
  %v245 = vpop.xlane.xlu0 %244
  %246 = vadd.xlane.f32.xlu0 %v175
  %v247 = vpop.xlane.xlu0 %246
  %248 = vadd.xlane.f32.xlu0 %v177
  %v249 = vpop.xlane.xlu0 %248
  %250 = vadd.xlane.f32.xlu0 %v180
  %v251 = vpop.xlane.xlu0 %250
  %252 = vadd.xlane.f32.xlu0 %v182
  %v253 = vpop.xlane.xlu0 %252
  %254 = vadd.xlane.f32.xlu0 %v185
  %v255 = vpop.xlane.xlu0 %254
  %256 = vadd.xlane.f32.xlu0 %v187
  %v257 = vpop.xlane.xlu0 %256
  %258 = vadd.xlane.f32.xlu0 %v190
  %v259 = vpop.xlane.xlu0 %258
  %260 = vadd.xlane.f32.xlu0 %v192
  %v261 = vpop.xlane.xlu0 %260
  %262 = vadd.xlane.f32.xlu0 %v195
  %v263 = vpop.xlane.xlu0 %262
  %264 = vadd.xlane.f32.xlu0 %v197
  %v265 = vpop.xlane.xlu0 %264
  %266 = vadd.xlane.f32.xlu0 %v200
  %v267 = vpop.xlane.xlu0 %266
  %268 = vadd.xlane.f32.xlu0 %v202
  %v269 = vpop.xlane.xlu0 %268
  %270 = vadd.xlane.f32.xlu0 %v205
  %v271 = vpop.xlane.xlu0 %270
  %272 = vadd.xlane.f32.xlu0 %v207
  %v273 = vpop.xlane.xlu0 %272
  %274 = vadd.xlane.f32.xlu0 %v210
  %v275 = vpop.xlane.xlu0 %274
  %276 = vadd.xlane.f32.xlu0 %v212
  %v277 = vpop.xlane.xlu0 %276
  %v278 = vmul.f32 %v215, 0.03125
  %v279 = vmul.f32 %v217, 0.03125
  %v280 = vmul.f32 %v219, 0.03125
  %v281 = vmul.f32 %v221, 0.03125
  %v282 = vmul.f32 %v223, 0.03125
  %v283 = vmul.f32 %v225, 0.03125
  %v284 = vmul.f32 %v227, 0.03125
  %v285 = vmul.f32 %v229, 0.03125
  %v286 = vmul.f32 %v231, 0.03125
  %v287 = vmul.f32 %v233, 0.03125
  %v288 = vmul.f32 %v235, 0.03125
  %v289 = vmul.f32 %v237, 0.03125
  %v290 = vmul.f32 %v239, 0.03125
  %v291 = vmul.f32 %v241, 0.03125
  %v292 = vmul.f32 %v243, 0.03125
  %v293 = vmul.f32 %v245, 0.03125
  %v294 = vmul.f32 %v247, 0.03125
  %v295 = vmul.f32 %v249, 0.03125
  %v296 = vmul.f32 %v251, 0.03125
  %v297 = vmul.f32 %v253, 0.03125
  %v298 = vmul.f32 %v255, 0.03125
  %v299 = vmul.f32 %v257, 0.03125
  %v300 = vmul.f32 %v259, 0.03125
  %v301 = vmul.f32 %v261, 0.03125
  %v302 = vmul.f32 %v263, 0.03125
  %v303 = vmul.f32 %v265, 0.03125
  %v304 = vmul.f32 %v267, 0.03125
  %v305 = vmul.f32 %v269, 0.03125
  %v306 = vmul.f32 %v271, 0.03125
  %v307 = vmul.f32 %v273, 0.03125
  %v308 = vmul.f32 %v275, 0.03125
  %v309 = vmul.f32 %v277, 0.03125
  %v310 = vmul.f32 %v135, %v135
  %v311 = vmul.f32 %v137, %v137
  %v312 = vmul.f32 %v140, %v140
  %v313 = vmul.f32 %v142, %v142
  %v314 = vmul.f32 %v145, %v145
  %v315 = vmul.f32 %v147, %v147
  %v316 = vmul.f32 %v150, %v150
  %v317 = vmul.f32 %v152, %v152
  %v318 = vmul.f32 %v155, %v155
  %v319 = vmul.f32 %v157, %v157
  %v320 = vmul.f32 %v160, %v160
  %v321 = vmul.f32 %v162, %v162
  %v322 = vmul.f32 %v165, %v165
  %v323 = vmul.f32 %v167, %v167
  %v324 = vmul.f32 %v170, %v170
  %v325 = vmul.f32 %v172, %v172
  %v326 = vmul.f32 %v175, %v175
  %v327 = vmul.f32 %v177, %v177
  %v328 = vmul.f32 %v180, %v180
  %v329 = vmul.f32 %v182, %v182
  %v330 = vmul.f32 %v185, %v185
  %v331 = vmul.f32 %v187, %v187
  %v332 = vmul.f32 %v190, %v190
  %v333 = vmul.f32 %v192, %v192
  %v334 = vmul.f32 %v195, %v195
  %v335 = vmul.f32 %v197, %v197
  %v336 = vmul.f32 %v200, %v200
  %v337 = vmul.f32 %v202, %v202
  %v338 = vmul.f32 %v205, %v205
  %v339 = vmul.f32 %v207, %v207
  %v340 = vmul.f32 %v210, %v210
  %v341 = vmul.f32 %v212, %v212
  %342 = vadd.xlane.f32.xlu0 %v310
  %v343 = vpop.xlane.xlu0 %342
  %344 = vadd.xlane.f32.xlu0 %v311
  %v345 = vpop.xlane.xlu0 %344
  %346 = vadd.xlane.f32.xlu0 %v312
  %v347 = vpop.xlane.xlu0 %346
  %348 = vadd.xlane.f32.xlu0 %v313
  %v349 = vpop.xlane.xlu0 %348
  %350 = vadd.xlane.f32.xlu0 %v314
  %v351 = vpop.xlane.xlu0 %350
  %352 = vadd.xlane.f32.xlu0 %v315
  %v353 = vpop.xlane.xlu0 %352
  %354 = vadd.xlane.f32.xlu0 %v316
  %v355 = vpop.xlane.xlu0 %354
  %356 = vadd.xlane.f32.xlu0 %v317
  %v357 = vpop.xlane.xlu0 %356
  %358 = vadd.xlane.f32.xlu0 %v318
  %v359 = vpop.xlane.xlu0 %358
  %360 = vadd.xlane.f32.xlu0 %v319
  %v361 = vpop.xlane.xlu0 %360
  %362 = vadd.xlane.f32.xlu0 %v320
  %v363 = vpop.xlane.xlu0 %362
  %364 = vadd.xlane.f32.xlu0 %v321
  %v365 = vpop.xlane.xlu0 %364
  %366 = vadd.xlane.f32.xlu0 %v322
  %v367 = vpop.xlane.xlu0 %366
  %368 = vadd.xlane.f32.xlu0 %v323
  %v369 = vpop.xlane.xlu0 %368
  %370 = vadd.xlane.f32.xlu0 %v324
  %v371 = vpop.xlane.xlu0 %370
  %372 = vadd.xlane.f32.xlu0 %v325
  %v373 = vpop.xlane.xlu0 %372
  %374 = vadd.xlane.f32.xlu0 %v326
  %v375 = vpop.xlane.xlu0 %374
  %376 = vadd.xlane.f32.xlu0 %v327
  %v377 = vpop.xlane.xlu0 %376
  %378 = vadd.xlane.f32.xlu0 %v328
  %v379 = vpop.xlane.xlu0 %378
  %380 = vadd.xlane.f32.xlu0 %v329
  %v381 = vpop.xlane.xlu0 %380
  %382 = vadd.xlane.f32.xlu0 %v330
  %v383 = vpop.xlane.xlu0 %382
  %384 = vadd.xlane.f32.xlu0 %v331
  %v385 = vpop.xlane.xlu0 %384
  %386 = vadd.xlane.f32.xlu0 %v332
  %v387 = vpop.xlane.xlu0 %386
  %388 = vadd.xlane.f32.xlu0 %v333
  %v389 = vpop.xlane.xlu0 %388
  %390 = vadd.xlane.f32.xlu0 %v334
  %v391 = vpop.xlane.xlu0 %390
  %392 = vadd.xlane.f32.xlu0 %v335
  %v393 = vpop.xlane.xlu0 %392
  %394 = vadd.xlane.f32.xlu0 %v336
  %v395 = vpop.xlane.xlu0 %394
  %396 = vadd.xlane.f32.xlu0 %v337
  %v397 = vpop.xlane.xlu0 %396
  %398 = vadd.xlane.f32.xlu0 %v338
  %v399 = vpop.xlane.xlu0 %398
  %400 = vadd.xlane.f32.xlu0 %v339
  %v401 = vpop.xlane.xlu0 %400
  %402 = vadd.xlane.f32.xlu0 %v340
  %v403 = vpop.xlane.xlu0 %402
  %404 = vadd.xlane.f32.xlu0 %v341
  %v405 = vpop.xlane.xlu0 %404
  %v406 = vmul.f32 %v343, 0.03125
  %v407 = vmul.f32 %v345, 0.03125
  %v408 = vmul.f32 %v347, 0.03125
  %v409 = vmul.f32 %v349, 0.03125
  %v410 = vmul.f32 %v351, 0.03125
  %v411 = vmul.f32 %v353, 0.03125
  %v412 = vmul.f32 %v355, 0.03125
  %v413 = vmul.f32 %v357, 0.03125
  %v414 = vmul.f32 %v359, 0.03125
  %v415 = vmul.f32 %v361, 0.03125
  %v416 = vmul.f32 %v363, 0.03125
  %v417 = vmul.f32 %v365, 0.03125
  %v418 = vmul.f32 %v367, 0.03125
  %v419 = vmul.f32 %v369, 0.03125
  %v420 = vmul.f32 %v371, 0.03125
  %v421 = vmul.f32 %v373, 0.03125
  %v422 = vmul.f32 %v375, 0.03125
  %v423 = vmul.f32 %v377, 0.03125
  %v424 = vmul.f32 %v379, 0.03125
  %v425 = vmul.f32 %v381, 0.03125
  %v426 = vmul.f32 %v383, 0.03125
  %v427 = vmul.f32 %v385, 0.03125
  %v428 = vmul.f32 %v387, 0.03125
  %v429 = vmul.f32 %v389, 0.03125
  %v430 = vmul.f32 %v391, 0.03125
  %v431 = vmul.f32 %v393, 0.03125
  %v432 = vmul.f32 %v395, 0.03125
  %v433 = vmul.f32 %v397, 0.03125
  %v434 = vmul.f32 %v399, 0.03125
  %v435 = vmul.f32 %v401, 0.03125
  %v436 = vmul.f32 %v403, 0.03125
  %v437 = vmul.f32 %v405, 0.03125
  %v438 = vmul.f32 %v278, %v278
  %v439 = vmul.f32 %v279, %v279
  %v440 = vmul.f32 %v280, %v280
  %v441 = vmul.f32 %v281, %v281
  %v442 = vmul.f32 %v282, %v282
  %v443 = vmul.f32 %v283, %v283
  %v444 = vmul.f32 %v284, %v284
  %v445 = vmul.f32 %v285, %v285
  %v446 = vmul.f32 %v286, %v286
  %v447 = vmul.f32 %v287, %v287
  %v448 = vmul.f32 %v288, %v288
  %v449 = vmul.f32 %v289, %v289
  %v450 = vmul.f32 %v290, %v290
  %v451 = vmul.f32 %v291, %v291
  %v452 = vmul.f32 %v292, %v292
  %v453 = vmul.f32 %v293, %v293
  %v454 = vmul.f32 %v294, %v294
  %v455 = vmul.f32 %v295, %v295
  %v456 = vmul.f32 %v296, %v296
  %v457 = vmul.f32 %v297, %v297
  %v458 = vmul.f32 %v298, %v298
  %v459 = vmul.f32 %v299, %v299
  %v460 = vmul.f32 %v300, %v300
  %v461 = vmul.f32 %v301, %v301
  %v462 = vmul.f32 %v302, %v302
  %v463 = vmul.f32 %v303, %v303
  %v464 = vmul.f32 %v304, %v304
  %v465 = vmul.f32 %v305, %v305
  %v466 = vmul.f32 %v306, %v306
  %v467 = vmul.f32 %v307, %v307
  %v468 = vmul.f32 %v308, %v308
  %v469 = vmul.f32 %v309, %v309
  %v470 = vsub.f32 %v406, %v438
  %v471 = vsub.f32 %v407, %v439
  %v472 = vsub.f32 %v408, %v440
  %v473 = vsub.f32 %v409, %v441
  %v474 = vsub.f32 %v410, %v442
  %v475 = vsub.f32 %v411, %v443
  %v476 = vsub.f32 %v412, %v444
  %v477 = vsub.f32 %v413, %v445
  %v478 = vsub.f32 %v414, %v446
  %v479 = vsub.f32 %v415, %v447
  %v480 = vsub.f32 %v416, %v448
  %v481 = vsub.f32 %v417, %v449
  %v482 = vsub.f32 %v418, %v450
  %v483 = vsub.f32 %v419, %v451
  %v484 = vsub.f32 %v420, %v452
  %v485 = vsub.f32 %v421, %v453
  %v486 = vsub.f32 %v422, %v454
  %v487 = vsub.f32 %v423, %v455
  %v488 = vsub.f32 %v424, %v456
  %v489 = vsub.f32 %v425, %v457
  %v490 = vsub.f32 %v426, %v458
  %v491 = vsub.f32 %v427, %v459
  %v492 = vsub.f32 %v428, %v460
  %v493 = vsub.f32 %v429, %v461
  %v494 = vsub.f32 %v430, %v462
  %v495 = vsub.f32 %v431, %v463
  %v496 = vsub.f32 %v432, %v464
  %v497 = vsub.f32 %v433, %v465
  %v498 = vsub.f32 %v434, %v466
  %v499 = vsub.f32 %v435, %v467
  %v500 = vsub.f32 %v436, %v468
  %v501 = vsub.f32 %v437, %v469
  %v502 = vsub.f32 %v135, %v278
  %v503 = vsub.f32 %v137, %v279
  %v504 = vsub.f32 %v140, %v280
  %v505 = vsub.f32 %v142, %v281
  %v506 = vsub.f32 %v145, %v282
  %v507 = vsub.f32 %v147, %v283
  %v508 = vsub.f32 %v150, %v284
  %v509 = vsub.f32 %v152, %v285
  %v510 = vsub.f32 %v155, %v286
  %v511 = vsub.f32 %v157, %v287
  %v512 = vsub.f32 %v160, %v288
  %v513 = vsub.f32 %v162, %v289
  %v514 = vsub.f32 %v165, %v290
  %v515 = vsub.f32 %v167, %v291
  %v516 = vsub.f32 %v170, %v292
  %v517 = vsub.f32 %v172, %v293
  %v518 = vsub.f32 %v175, %v294
  %v519 = vsub.f32 %v177, %v295
  %v520 = vsub.f32 %v180, %v296
  %v521 = vsub.f32 %v182, %v297
  %v522 = vsub.f32 %v185, %v298
  %v523 = vsub.f32 %v187, %v299
  %v524 = vsub.f32 %v190, %v300
  %v525 = vsub.f32 %v192, %v301
  %v526 = vsub.f32 %v195, %v302
  %v527 = vsub.f32 %v197, %v303
  %v528 = vsub.f32 %v200, %v304
  %v529 = vsub.f32 %v202, %v305
  %v530 = vsub.f32 %v205, %v306
  %v531 = vsub.f32 %v207, %v307
  %v532 = vsub.f32 %v210, %v308
  %v533 = vsub.f32 %v212, %v309
  %v534 = vadd.f32 %v470, 1e-05
  %v535 = vadd.f32 %v471, 1e-05
  %v536 = vadd.f32 %v472, 1e-05
  %v537 = vadd.f32 %v473, 1e-05
  %v538 = vadd.f32 %v474, 1e-05
  %v539 = vadd.f32 %v475, 1e-05
  %v540 = vadd.f32 %v476, 1e-05
  %v541 = vadd.f32 %v477, 1e-05
  %v542 = vadd.f32 %v478, 1e-05
  %v543 = vadd.f32 %v479, 1e-05
  %v544 = vadd.f32 %v480, 1e-05
  %v545 = vadd.f32 %v481, 1e-05
  %v546 = vadd.f32 %v482, 1e-05
  %v547 = vadd.f32 %v483, 1e-05
  %v548 = vadd.f32 %v484, 1e-05
  %v549 = vadd.f32 %v485, 1e-05
  %v550 = vadd.f32 %v486, 1e-05
  %v551 = vadd.f32 %v487, 1e-05
  %v552 = vadd.f32 %v488, 1e-05
  %v553 = vadd.f32 %v489, 1e-05
  %v554 = vadd.f32 %v490, 1e-05
  %v555 = vadd.f32 %v491, 1e-05
  %v556 = vadd.f32 %v492, 1e-05
  %v557 = vadd.f32 %v493, 1e-05
  %v558 = vadd.f32 %v494, 1e-05
  %v559 = vadd.f32 %v495, 1e-05
  %v560 = vadd.f32 %v496, 1e-05
  %v561 = vadd.f32 %v497, 1e-05
  %v562 = vadd.f32 %v498, 1e-05
  %v563 = vadd.f32 %v499, 1e-05
  %v564 = vadd.f32 %v500, 1e-05
  %v565 = vadd.f32 %v501, 1e-05
  %v566 = vrsqrt.pop %v534
  %v567 = vmul.f32 %v566, %v534
  %v568 = vmul.f32 %v567, %v566
  %v569 = vmul.f32 0.5, %v568
  %v570 = vsub.f32 1.5, %v569
  %v571 = vmul.f32 %v566, %v570
  %vm572 = vweird.f32 %v534
  %vm573 = vweird.f32 %v566
  %vm574 = vmor %vm572, %vm573
  %v575 = vsel %vm574, %v566, %v571
  %v576 = vrsqrt.pop %v535
  %v577 = vmul.f32 %v576, %v535
  %v578 = vmul.f32 %v577, %v576
  %v579 = vmul.f32 0.5, %v578
  %v580 = vsub.f32 1.5, %v579
  %v581 = vmul.f32 %v576, %v580
  %vm582 = vweird.f32 %v535
  %vm583 = vweird.f32 %v576
  %vm584 = vmor %vm582, %vm583
  %v585 = vsel %vm584, %v576, %v581
  %v586 = vrsqrt.pop %v536
  %v587 = vmul.f32 %v586, %v536
  %v588 = vmul.f32 %v587, %v586
  %v589 = vmul.f32 0.5, %v588
  %v590 = vsub.f32 1.5, %v589
  %v591 = vmul.f32 %v586, %v590
  %vm592 = vweird.f32 %v536
  %vm593 = vweird.f32 %v586
  %vm594 = vmor %vm592, %vm593
  %v595 = vsel %vm594, %v586, %v591
  %v596 = vrsqrt.pop %v537
  %v597 = vmul.f32 %v596, %v537
  %v598 = vmul.f32 %v597, %v596
  %v599 = vmul.f32 0.5, %v598
  %v600 = vsub.f32 1.5, %v599
  %v601 = vmul.f32 %v596, %v600
  %vm602 = vweird.f32 %v537
  %vm603 = vweird.f32 %v596
  %vm604 = vmor %vm602, %vm603
  %v605 = vsel %vm604, %v596, %v601
  %v606 = vrsqrt.pop %v538
  %v607 = vmul.f32 %v606, %v538
  %v608 = vmul.f32 %v607, %v606
  %v609 = vmul.f32 0.5, %v608
  %v610 = vsub.f32 1.5, %v609
  %v611 = vmul.f32 %v606, %v610
  %vm612 = vweird.f32 %v538
  %vm613 = vweird.f32 %v606
  %vm614 = vmor %vm612, %vm613
  %v615 = vsel %vm614, %v606, %v611
  %v616 = vrsqrt.pop %v539
  %v617 = vmul.f32 %v616, %v539
  %v618 = vmul.f32 %v617, %v616
  %v619 = vmul.f32 0.5, %v618
  %v620 = vsub.f32 1.5, %v619
  %v621 = vmul.f32 %v616, %v620
  %vm622 = vweird.f32 %v539
  %vm623 = vweird.f32 %v616
  %vm624 = vmor %vm622, %vm623
  %v625 = vsel %vm624, %v616, %v621
  %v626 = vrsqrt.pop %v540
  %v627 = vmul.f32 %v626, %v540
  %v628 = vmul.f32 %v627, %v626
  %v629 = vmul.f32 0.5, %v628
  %v630 = vsub.f32 1.5, %v629
  %v631 = vmul.f32 %v626, %v630
  %vm632 = vweird.f32 %v540
  %vm633 = vweird.f32 %v626
  %vm634 = vmor %vm632, %vm633
  %v635 = vsel %vm634, %v626, %v631
  %v636 = vrsqrt.pop %v541
  %v637 = vmul.f32 %v636, %v541
  %v638 = vmul.f32 %v637, %v636
  %v639 = vmul.f32 0.5, %v638
  %v640 = vsub.f32 1.5, %v639
  %v641 = vmul.f32 %v636, %v640
  %vm642 = vweird.f32 %v541
  %vm643 = vweird.f32 %v636
  %vm644 = vmor %vm642, %vm643
  %v645 = vsel %vm644, %v636, %v641
  %v646 = vrsqrt.pop %v542
  %v647 = vmul.f32 %v646, %v542
  %v648 = vmul.f32 %v647, %v646
  %v649 = vmul.f32 0.5, %v648
  %v650 = vsub.f32 1.5, %v649
  %v651 = vmul.f32 %v646, %v650
  %vm652 = vweird.f32 %v542
  %vm653 = vweird.f32 %v646
  %vm654 = vmor %vm652, %vm653
  %v655 = vsel %vm654, %v646, %v651
  %v656 = vrsqrt.pop %v543
  %v657 = vmul.f32 %v656, %v543
  %v658 = vmul.f32 %v657, %v656
  %v659 = vmul.f32 0.5, %v658
  %v660 = vsub.f32 1.5, %v659
  %v661 = vmul.f32 %v656, %v660
  %vm662 = vweird.f32 %v543
  %vm663 = vweird.f32 %v656
  %vm664 = vmor %vm662, %vm663
  %v665 = vsel %vm664, %v656, %v661
  %v666 = vrsqrt.pop %v544
  %v667 = vmul.f32 %v666, %v544
  %v668 = vmul.f32 %v667, %v666
  %v669 = vmul.f32 0.5, %v668
  %v670 = vsub.f32 1.5, %v669
  %v671 = vmul.f32 %v666, %v670
  %vm672 = vweird.f32 %v544
  %vm673 = vweird.f32 %v666
  %vm674 = vmor %vm672, %vm673
  %v675 = vsel %vm674, %v666, %v671
  %v676 = vrsqrt.pop %v545
  %v677 = vmul.f32 %v676, %v545
  %v678 = vmul.f32 %v677, %v676
  %v679 = vmul.f32 0.5, %v678
  %v680 = vsub.f32 1.5, %v679
  %v681 = vmul.f32 %v676, %v680
  %vm682 = vweird.f32 %v545
  %vm683 = vweird.f32 %v676
  %vm684 = vmor %vm682, %vm683
  %v685 = vsel %vm684, %v676, %v681
  %v686 = vrsqrt.pop %v546
  %v687 = vmul.f32 %v686, %v546
  %v688 = vmul.f32 %v687, %v686
  %v689 = vmul.f32 0.5, %v688
  %v690 = vsub.f32 1.5, %v689
  %v691 = vmul.f32 %v686, %v690
  %vm692 = vweird.f32 %v546
  %vm693 = vweird.f32 %v686
  %vm694 = vmor %vm692, %vm693
  %v695 = vsel %vm694, %v686, %v691
  %v696 = vrsqrt.pop %v547
  %v697 = vmul.f32 %v696, %v547
  %v698 = vmul.f32 %v697, %v696
  %v699 = vmul.f32 0.5, %v698
  %v700 = vsub.f32 1.5, %v699
  %v701 = vmul.f32 %v696, %v700
  %vm702 = vweird.f32 %v547
  %vm703 = vweird.f32 %v696
  %vm704 = vmor %vm702, %vm703
  %v705 = vsel %vm704, %v696, %v701
  %v706 = vrsqrt.pop %v548
  %v707 = vmul.f32 %v706, %v548
  %v708 = vmul.f32 %v707, %v706
  %v709 = vmul.f32 0.5, %v708
  %v710 = vsub.f32 1.5, %v709
  %v711 = vmul.f32 %v706, %v710
  %vm712 = vweird.f32 %v548
  %vm713 = vweird.f32 %v706
  %vm714 = vmor %vm712, %vm713
  %v715 = vsel %vm714, %v706, %v711
  %v716 = vrsqrt.pop %v549
  %v717 = vmul.f32 %v716, %v549
  %v718 = vmul.f32 %v717, %v716
  %v719 = vmul.f32 0.5, %v718
  %v720 = vsub.f32 1.5, %v719
  %v721 = vmul.f32 %v716, %v720
  %vm722 = vweird.f32 %v549
  %vm723 = vweird.f32 %v716
  %vm724 = vmor %vm722, %vm723
  %v725 = vsel %vm724, %v716, %v721
  %v726 = vrsqrt.pop %v550
  %v727 = vmul.f32 %v726, %v550
  %v728 = vmul.f32 %v727, %v726
  %v729 = vmul.f32 0.5, %v728
  %v730 = vsub.f32 1.5, %v729
  %v731 = vmul.f32 %v726, %v730
  %vm732 = vweird.f32 %v550
  %vm733 = vweird.f32 %v726
  %vm734 = vmor %vm732, %vm733
  %v735 = vsel %vm734, %v726, %v731
  %v736 = vrsqrt.pop %v551
  %v737 = vmul.f32 %v736, %v551
  %v738 = vmul.f32 %v737, %v736
  %v739 = vmul.f32 0.5, %v738
  %v740 = vsub.f32 1.5, %v739
  %v741 = vmul.f32 %v736, %v740
  %vm742 = vweird.f32 %v551
  %vm743 = vweird.f32 %v736
  %vm744 = vmor %vm742, %vm743
  %v745 = vsel %vm744, %v736, %v741
  %v746 = vrsqrt.pop %v552
  %v747 = vmul.f32 %v746, %v552
  %v748 = vmul.f32 %v747, %v746
  %v749 = vmul.f32 0.5, %v748
  %v750 = vsub.f32 1.5, %v749
  %v751 = vmul.f32 %v746, %v750
  %vm752 = vweird.f32 %v552
  %vm753 = vweird.f32 %v746
  %vm754 = vmor %vm752, %vm753
  %v755 = vsel %vm754, %v746, %v751
  %v756 = vrsqrt.pop %v553
  %v757 = vmul.f32 %v756, %v553
  %v758 = vmul.f32 %v757, %v756
  %v759 = vmul.f32 0.5, %v758
  %v760 = vsub.f32 1.5, %v759
  %v761 = vmul.f32 %v756, %v760
  %vm762 = vweird.f32 %v553
  %vm763 = vweird.f32 %v756
  %vm764 = vmor %vm762, %vm763
  %v765 = vsel %vm764, %v756, %v761
  %v766 = vrsqrt.pop %v554
  %v767 = vmul.f32 %v766, %v554
  %v768 = vmul.f32 %v767, %v766
  %v769 = vmul.f32 0.5, %v768
  %v770 = vsub.f32 1.5, %v769
  %v771 = vmul.f32 %v766, %v770
  %vm772 = vweird.f32 %v554
  %vm773 = vweird.f32 %v766
  %vm774 = vmor %vm772, %vm773
  %v775 = vsel %vm774, %v766, %v771
  %v776 = vrsqrt.pop %v555
  %v777 = vmul.f32 %v776, %v555
  %v778 = vmul.f32 %v777, %v776
  %v779 = vmul.f32 0.5, %v778
  %v780 = vsub.f32 1.5, %v779
  %v781 = vmul.f32 %v776, %v780
  %vm782 = vweird.f32 %v555
  %vm783 = vweird.f32 %v776
  %vm784 = vmor %vm782, %vm783
  %v785 = vsel %vm784, %v776, %v781
  %v786 = vrsqrt.pop %v556
  %v787 = vmul.f32 %v786, %v556
  %v788 = vmul.f32 %v787, %v786
  %v789 = vmul.f32 0.5, %v788
  %v790 = vsub.f32 1.5, %v789
  %v791 = vmul.f32 %v786, %v790
  %vm792 = vweird.f32 %v556
  %vm793 = vweird.f32 %v786
  %vm794 = vmor %vm792, %vm793
  %v795 = vsel %vm794, %v786, %v791
  %v796 = vrsqrt.pop %v557
  %v797 = vmul.f32 %v796, %v557
  %v798 = vmul.f32 %v797, %v796
  %v799 = vmul.f32 0.5, %v798
  %v800 = vsub.f32 1.5, %v799
  %v801 = vmul.f32 %v796, %v800
  %vm802 = vweird.f32 %v557
  %vm803 = vweird.f32 %v796
  %vm804 = vmor %vm802, %vm803
  %v805 = vsel %vm804, %v796, %v801
  %v806 = vrsqrt.pop %v558
  %v807 = vmul.f32 %v806, %v558
  %v808 = vmul.f32 %v807, %v806
  %v809 = vmul.f32 0.5, %v808
  %v810 = vsub.f32 1.5, %v809
  %v811 = vmul.f32 %v806, %v810
  %vm812 = vweird.f32 %v558
  %vm813 = vweird.f32 %v806
  %vm814 = vmor %vm812, %vm813
  %v815 = vsel %vm814, %v806, %v811
  %v816 = vrsqrt.pop %v559
  %v817 = vmul.f32 %v816, %v559
  %v818 = vmul.f32 %v817, %v816
  %v819 = vmul.f32 0.5, %v818
  %v820 = vsub.f32 1.5, %v819
  %v821 = vmul.f32 %v816, %v820
  %vm822 = vweird.f32 %v559
  %vm823 = vweird.f32 %v816
  %vm824 = vmor %vm822, %vm823
  %v825 = vsel %vm824, %v816, %v821
  %v826 = vrsqrt.pop %v560
  %v827 = vmul.f32 %v826, %v560
  %v828 = vmul.f32 %v827, %v826
  %v829 = vmul.f32 0.5, %v828
  %v830 = vsub.f32 1.5, %v829
  %v831 = vmul.f32 %v826, %v830
  %vm832 = vweird.f32 %v560
  %vm833 = vweird.f32 %v826
  %vm834 = vmor %vm832, %vm833
  %v835 = vsel %vm834, %v826, %v831
  %v836 = vrsqrt.pop %v561
  %v837 = vmul.f32 %v836, %v561
  %v838 = vmul.f32 %v837, %v836
  %v839 = vmul.f32 0.5, %v838
  %v840 = vsub.f32 1.5, %v839
  %v841 = vmul.f32 %v836, %v840
  %vm842 = vweird.f32 %v561
  %vm843 = vweird.f32 %v836
  %vm844 = vmor %vm842, %vm843
  %v845 = vsel %vm844, %v836, %v841
  %v846 = vrsqrt.pop %v562
  %v847 = vmul.f32 %v846, %v562
  %v848 = vmul.f32 %v847, %v846
  %v849 = vmul.f32 0.5, %v848
  %v850 = vsub.f32 1.5, %v849
  %v851 = vmul.f32 %v846, %v850
  %vm852 = vweird.f32 %v562
  %vm853 = vweird.f32 %v846
  %vm854 = vmor %vm852, %vm853
  %v855 = vsel %vm854, %v846, %v851
  %v856 = vrsqrt.pop %v563
  %v857 = vmul.f32 %v856, %v563
  %v858 = vmul.f32 %v857, %v856
  %v859 = vmul.f32 0.5, %v858
  %v860 = vsub.f32 1.5, %v859
  %v861 = vmul.f32 %v856, %v860
  %vm862 = vweird.f32 %v563
  %vm863 = vweird.f32 %v856
  %vm864 = vmor %vm862, %vm863
  %v865 = vsel %vm864, %v856, %v861
  %v866 = vrsqrt.pop %v564
  %v867 = vmul.f32 %v866, %v564
  %v868 = vmul.f32 %v867, %v866
  %v869 = vmul.f32 0.5, %v868
  %v870 = vsub.f32 1.5, %v869
  %v871 = vmul.f32 %v866, %v870
  %vm872 = vweird.f32 %v564
  %vm873 = vweird.f32 %v866
  %vm874 = vmor %vm872, %vm873
  %v875 = vsel %vm874, %v866, %v871
  %v876 = vrsqrt.pop %v565
  %v877 = vmul.f32 %v876, %v565
  %v878 = vmul.f32 %v877, %v876
  %v879 = vmul.f32 0.5, %v878
  %v880 = vsub.f32 1.5, %v879
  %v881 = vmul.f32 %v876, %v880
  %vm882 = vweird.f32 %v565
  %vm883 = vweird.f32 %v876
  %vm884 = vmor %vm882, %vm883
  %v885 = vsel %vm884, %v876, %v881
  %v886 = vmul.f32 %v502, %v575
  %v887 = vmul.f32 %v503, %v585
  %v888 = vmul.f32 %v504, %v595
  %v889 = vmul.f32 %v505, %v605
  %v890 = vmul.f32 %v506, %v615
  %v891 = vmul.f32 %v507, %v625
  %v892 = vmul.f32 %v508, %v635
  %v893 = vmul.f32 %v509, %v645
  %v894 = vmul.f32 %v510, %v655
  %v895 = vmul.f32 %v511, %v665
  %v896 = vmul.f32 %v512, %v675
  %v897 = vmul.f32 %v513, %v685
  %v898 = vmul.f32 %v514, %v695
  %v899 = vmul.f32 %v515, %v705
  %v900 = vmul.f32 %v516, %v715
  %v901 = vmul.f32 %v517, %v725
  %v902 = vmul.f32 %v518, %v735
  %v903 = vmul.f32 %v519, %v745
  %v904 = vmul.f32 %v520, %v755
  %v905 = vmul.f32 %v521, %v765
  %v906 = vmul.f32 %v522, %v775
  %v907 = vmul.f32 %v523, %v785
  %v908 = vmul.f32 %v524, %v795
  %v909 = vmul.f32 %v525, %v805
  %v910 = vmul.f32 %v526, %v815
  %v911 = vmul.f32 %v527, %v825
  %v912 = vmul.f32 %v528, %v835
  %v913 = vmul.f32 %v529, %v845
  %v914 = vmul.f32 %v530, %v855
  %v915 = vmul.f32 %v531, %v865
  %v916 = vmul.f32 %v532, %v875
  %v917 = vmul.f32 %v533, %v885
  %v918 = vperm.slane %v68, 1
  %v919 = vmul.f32 %v886, %v918
  %v920 = vmul.f32 %v887, %v918
  %v921 = vmul.f32 %v888, %v918
  %v922 = vmul.f32 %v889, %v918
  %v923 = vmul.f32 %v890, %v918
  %v924 = vmul.f32 %v891, %v918
  %v925 = vmul.f32 %v892, %v918
  %v926 = vmul.f32 %v893, %v918
  %v927 = vmul.f32 %v894, %v918
  %v928 = vmul.f32 %v895, %v918
  %v929 = vmul.f32 %v896, %v918
  %v930 = vmul.f32 %v897, %v918
  %v931 = vmul.f32 %v898, %v918
  %v932 = vmul.f32 %v899, %v918
  %v933 = vmul.f32 %v900, %v918
  %v934 = vmul.f32 %v901, %v918
  %v935 = vmul.f32 %v902, %v918
  %v936 = vmul.f32 %v903, %v918
  %v937 = vmul.f32 %v904, %v918
  %v938 = vmul.f32 %v905, %v918
  %v939 = vmul.f32 %v906, %v918
  %v940 = vmul.f32 %v907, %v918
  %v941 = vmul.f32 %v908, %v918
  %v942 = vmul.f32 %v909, %v918
  %v943 = vmul.f32 %v910, %v918
  %v944 = vmul.f32 %v911, %v918
  %v945 = vmul.f32 %v912, %v918
  %v946 = vmul.f32 %v913, %v918
  %v947 = vmul.f32 %v914, %v918
  %v948 = vmul.f32 %v915, %v918
  %v949 = vmul.f32 %v916, %v918
  %v950 = vmul.f32 %v917, %v918
  %v951 = vperm.slane %v68, 2
  %v952 = vadd.f32 %v919, %v951
  %v953 = vadd.f32 %v920, %v951
  %v954 = vadd.f32 %v921, %v951
  %v955 = vadd.f32 %v922, %v951
  %v956 = vadd.f32 %v923, %v951
  %v957 = vadd.f32 %v924, %v951
  %v958 = vadd.f32 %v925, %v951
  %v959 = vadd.f32 %v926, %v951
  %v960 = vadd.f32 %v927, %v951
  %v961 = vadd.f32 %v928, %v951
  %v962 = vadd.f32 %v929, %v951
  %v963 = vadd.f32 %v930, %v951
  %v964 = vadd.f32 %v931, %v951
  %v965 = vadd.f32 %v932, %v951
  %v966 = vadd.f32 %v933, %v951
  %v967 = vadd.f32 %v934, %v951
  %v968 = vadd.f32 %v935, %v951
  %v969 = vadd.f32 %v936, %v951
  %v970 = vadd.f32 %v937, %v951
  %v971 = vadd.f32 %v938, %v951
  %v972 = vadd.f32 %v939, %v951
  %v973 = vadd.f32 %v940, %v951
  %v974 = vadd.f32 %v941, %v951
  %v975 = vadd.f32 %v942, %v951
  %v976 = vadd.f32 %v943, %v951
  %v977 = vadd.f32 %v944, %v951
  %v978 = vadd.f32 %v945, %v951
  %v979 = vadd.f32 %v946, %v951
  %v980 = vadd.f32 %v947, %v951
  %v981 = vadd.f32 %v948, %v951
  %v982 = vadd.f32 %v949, %v951
  %v983 = vadd.f32 %v950, %v951
  %v984 = vmax.f32 %v952, 0.0
  %v985 = vmax.f32 %v953, 0.0
  %v986 = vmax.f32 %v954, 0.0
  %v987 = vmax.f32 %v955, 0.0
  %v988 = vmax.f32 %v956, 0.0
  %v989 = vmax.f32 %v957, 0.0
  %v990 = vmax.f32 %v958, 0.0
  %v991 = vmax.f32 %v959, 0.0
  %v992 = vmax.f32 %v960, 0.0
  %v993 = vmax.f32 %v961, 0.0
  %v994 = vmax.f32 %v962, 0.0
  %v995 = vmax.f32 %v963, 0.0
  %v996 = vmax.f32 %v964, 0.0
  %v997 = vmax.f32 %v965, 0.0
  %v998 = vmax.f32 %v966, 0.0
  %v999 = vmax.f32 %v967, 0.0
  %v1000 = vmax.f32 %v968, 0.0
  %v1001 = vmax.f32 %v969, 0.0
  %v1002 = vmax.f32 %v970, 0.0
  %v1003 = vmax.f32 %v971, 0.0
  %v1004 = vmax.f32 %v972, 0.0
  %v1005 = vmax.f32 %v973, 0.0
  %v1006 = vmax.f32 %v974, 0.0
  %v1007 = vmax.f32 %v975, 0.0
  %v1008 = vmax.f32 %v976, 0.0
  %v1009 = vmax.f32 %v977, 0.0
  %v1010 = vmax.f32 %v978, 0.0
  %v1011 = vmax.f32 %v979, 0.0
  %v1012 = vmax.f32 %v980, 0.0
  %v1013 = vmax.f32 %v981, 0.0
  %v1014 = vmax.f32 %v982, 0.0
  %v1015 = vmax.f32 %v983, 0.0
  %v1016 = vpack.c.bf16 %v985, %v984
  %v1017 = vpack.c.bf16 %v987, %v986
  %v1018 = vpack.c.bf16 %v989, %v988
  %v1019 = vpack.c.bf16 %v991, %v990
  %v1020 = vpack.c.bf16 %v993, %v992
  %v1021 = vpack.c.bf16 %v995, %v994
  %v1022 = vpack.c.bf16 %v997, %v996
  %v1023 = vpack.c.bf16 %v999, %v998
  %v1024 = vpack.c.bf16 %v1001, %v1000
  %v1025 = vpack.c.bf16 %v1003, %v1002
  %v1026 = vpack.c.bf16 %v1005, %v1004
  %v1027 = vpack.c.bf16 %v1007, %v1006
  %v1028 = vpack.c.bf16 %v1009, %v1008
  %v1029 = vpack.c.bf16 %v1011, %v1010
  %v1030 = vpack.c.bf16 %v1013, %v1012
  %v1031 = vpack.c.bf16 %v1015, %v1014
  %v1032 = vld [vmem:[%s3] sm:$0xf]
  %v1033 = vld [vmem:[%s3 + $0x4] sm:$0xf]
  %v1034 = vld [vmem:[%s3 + $0x8] sm:$0xf]
  %v1035 = vld [vmem:[%s3 + $0xc] sm:$0xf]
  %v1036 = vld [vmem:[%s3 + $0x10] sm:$0xf]
  %v1037 = vld [vmem:[%s3 + $0x14] sm:$0xf]
  %v1038 = vld [vmem:[%s3 + $0x18] sm:$0xf]
  %v1039 = vld [vmem:[%s3 + $0x1c] sm:$0xf]
  %v1040 = vld [vmem:[%s3 + $0x20] sm:$0xf]
  %v1041 = vld [vmem:[%s3 + $0x24] sm:$0xf]
  %v1042 = vld [vmem:[%s3 + $0x28] sm:$0xf]
  %v1043 = vld [vmem:[%s3 + $0x2c] sm:$0xf]
  %v1044 = vld [vmem:[%s3 + $0x30] sm:$0xf]
  %v1045 = vld [vmem:[%s3 + $0x34] sm:$0xf]
  %v1046 = vld [vmem:[%s3 + $0x38] sm:$0xf]
  %v1047 = vld [vmem:[%s3 + $0x3c] sm:$0xf]
  %v1048 = vperm.slane %v68, 3
  %v1065 = vunpack.c.l.b16 %v1032
  %v1066 = vunpack.c.l.b16 %v1033
  %v1067 = vunpack.c.l.b16 %v1034
  %v1068 = vunpack.c.l.b16 %v1035
  %v1069 = vunpack.c.l.b16 %v1036
  %v1070 = vunpack.c.l.b16 %v1037
  %v1071 = vunpack.c.l.b16 %v1038
  %v1072 = vunpack.c.l.b16 %v1039
  %v1073 = vunpack.c.l.b16 %v1040
  %v1074 = vunpack.c.l.b16 %v1041
  %v1075 = vunpack.c.l.b16 %v1042
  %v1076 = vunpack.c.l.b16 %v1043
  %v1077 = vunpack.c.l.b16 %v1044
  %v1078 = vunpack.c.l.b16 %v1045
  %v1079 = vunpack.c.l.b16 %v1046
  %v1080 = vunpack.c.l.b16 %v1047
  %v1081 = vpack.c.b16 %v1066, %v1065
  %v1082 = vpack.c.b16 %v1068, %v1067
  %v1083 = vpack.c.b16 %v1070, %v1069
  %v1084 = vpack.c.b16 %v1072, %v1071
  %v1085 = vpack.c.b16 %v1074, %v1073
  %v1086 = vpack.c.b16 %v1076, %v1075
  %v1087 = vpack.c.b16 %v1078, %v1077
  %v1088 = vpack.c.b16 %v1080, %v1079
  %1097 = vmatpush.bf16.msra.mxu0 %v1088
  %1098 = vmatpush.bf16.msra.mxu0 %v1087
  %1099 = vmatpush.bf16.msra.mxu0 %v1086
  %1100 = vmatpush.bf16.msra.mxu0 %v1085
  %1101 = vmatpush.bf16.msra.mxu0 %v1084
  %1102 = vmatpush.bf16.msra.mxu0 %v1083
  %1103 = vmatpush.bf16.msra.mxu0 %v1082
  %1104 = vmatpush.bf16.msra.mxu0 %v1081
  %1105 = vmatmul.bf16.gmra.mxu0 %v1016
  %v1106 = vpop.f32.mrf.mxu0
  %v1107 = vadd.f32 %v1048, %v1106
  %v1108 = vpop.f32.mrf.mxu0
  %v1109 = vadd.f32 %v1048, %v1108
  %1110 = vmatmul.bf16.gmra.mxu0 %v1017
  %v1111 = vpop.f32.mrf.mxu0
  %v1112 = vadd.f32 %v1048, %v1111
  %v1113 = vpop.f32.mrf.mxu0
  %v1114 = vadd.f32 %v1048, %v1113
  %1115 = vmatmul.bf16.gmra.mxu0 %v1018
  %v1116 = vpop.f32.mrf.mxu0
  %v1117 = vadd.f32 %v1048, %v1116
  %v1118 = vpop.f32.mrf.mxu0
  %v1119 = vadd.f32 %v1048, %v1118
  %1120 = vmatmul.bf16.gmra.mxu0 %v1019
  %v1121 = vpop.f32.mrf.mxu0
  %v1122 = vadd.f32 %v1048, %v1121
  %v1123 = vpop.f32.mrf.mxu0
  %v1124 = vadd.f32 %v1048, %v1123
  %1125 = vmatmul.bf16.gmra.mxu0 %v1020
  %v1126 = vpop.f32.mrf.mxu0
  %v1127 = vadd.f32 %v1048, %v1126
  %v1128 = vpop.f32.mrf.mxu0
  %v1129 = vadd.f32 %v1048, %v1128
  %1130 = vmatmul.bf16.gmra.mxu0 %v1021
  %v1131 = vpop.f32.mrf.mxu0
  %v1132 = vadd.f32 %v1048, %v1131
  %v1133 = vpop.f32.mrf.mxu0
  %v1134 = vadd.f32 %v1048, %v1133
  %1135 = vmatmul.bf16.gmra.mxu0 %v1022
  %v1136 = vpop.f32.mrf.mxu0
  %v1137 = vadd.f32 %v1048, %v1136
  %v1138 = vpop.f32.mrf.mxu0
  %v1139 = vadd.f32 %v1048, %v1138
  %1140 = vmatmul.bf16.gmra.mxu0 %v1023
  %v1141 = vpop.f32.mrf.mxu0
  %v1142 = vadd.f32 %v1048, %v1141
  %v1143 = vpop.f32.mrf.mxu0
  %v1144 = vadd.f32 %v1048, %v1143
  %1145 = vmatmul.bf16.gmra.mxu0 %v1024
  %v1146 = vpop.f32.mrf.mxu0
  %v1147 = vadd.f32 %v1048, %v1146
  %v1148 = vpop.f32.mrf.mxu0
  %v1149 = vadd.f32 %v1048, %v1148
  %1150 = vmatmul.bf16.gmra.mxu0 %v1025
  %v1151 = vpop.f32.mrf.mxu0
  %v1152 = vadd.f32 %v1048, %v1151
  %v1153 = vpop.f32.mrf.mxu0
  %v1154 = vadd.f32 %v1048, %v1153
  %1155 = vmatmul.bf16.gmra.mxu0 %v1026
  %v1156 = vpop.f32.mrf.mxu0
  %v1157 = vadd.f32 %v1048, %v1156
  %v1158 = vpop.f32.mrf.mxu0
  %v1159 = vadd.f32 %v1048, %v1158
  %1160 = vmatmul.bf16.gmra.mxu0 %v1027
  %v1161 = vpop.f32.mrf.mxu0
  %v1162 = vadd.f32 %v1048, %v1161
  %v1163 = vpop.f32.mrf.mxu0
  %v1164 = vadd.f32 %v1048, %v1163
  %1165 = vmatmul.bf16.gmra.mxu0 %v1028
  %v1166 = vpop.f32.mrf.mxu0
  %v1167 = vadd.f32 %v1048, %v1166
  %v1168 = vpop.f32.mrf.mxu0
  %v1169 = vadd.f32 %v1048, %v1168
  %1170 = vmatmul.bf16.gmra.mxu0 %v1029
  %v1171 = vpop.f32.mrf.mxu0
  %v1172 = vadd.f32 %v1048, %v1171
  %v1173 = vpop.f32.mrf.mxu0
  %v1174 = vadd.f32 %v1048, %v1173
  %1175 = vmatmul.bf16.gmra.mxu0 %v1030
  %v1176 = vpop.f32.mrf.mxu0
  %v1177 = vadd.f32 %v1048, %v1176
  %v1178 = vpop.f32.mrf.mxu0
  %v1179 = vadd.f32 %v1048, %v1178
  %1180 = vmatmul.bf16.gmra.mxu0 %v1031
  %v1181 = vpop.f32.mrf.mxu0
  %v1182 = vadd.f32 %v1048, %v1181
  %v1183 = vpop.f32.mrf.mxu0
  %v1184 = vadd.f32 %v1048, %v1183
  %1185 = vdwg.mxu0
  %vm1186 = vcmask 64512
  %1187 = vst.msk [vmem:[%s4] sm:$0xff] %vm1186, %v1107
  %1188 = vst.msk [vmem:[%s4 + $0x8] sm:$0xff] %vm1186, %v1109
  %1189 = vst.msk [vmem:[%s4 + $0x10] sm:$0xff] %vm1186, %v1112
  %1190 = vst.msk [vmem:[%s4 + $0x18] sm:$0xff] %vm1186, %v1114
  %1191 = vst.msk [vmem:[%s4 + $0x20] sm:$0xff] %vm1186, %v1117
  %1192 = vst.msk [vmem:[%s4 + $0x28] sm:$0xff] %vm1186, %v1119
  %1193 = vst.msk [vmem:[%s4 + $0x30] sm:$0xff] %vm1186, %v1122
  %1194 = vst.msk [vmem:[%s4 + $0x38] sm:$0xff] %vm1186, %v1124
  %1195 = vst.msk [vmem:[%s4 + $0x40] sm:$0xff] %vm1186, %v1127
  %1196 = vst.msk [vmem:[%s4 + $0x48] sm:$0xff] %vm1186, %v1129
  %1197 = vst.msk [vmem:[%s4 + $0x50] sm:$0xff] %vm1186, %v1132
  %1198 = vst.msk [vmem:[%s4 + $0x58] sm:$0xff] %vm1186, %v1134
  %1199 = vst.msk [vmem:[%s4 + $0x60] sm:$0xff] %vm1186, %v1137
  %1200 = vst.msk [vmem:[%s4 + $0x68] sm:$0xff] %vm1186, %v1139
  %1201 = vst.msk [vmem:[%s4 + $0x70] sm:$0xff] %vm1186, %v1142
  %1202 = vst.msk [vmem:[%s4 + $0x78] sm:$0xff] %vm1186, %v1144
  %1203 = vst.msk [vmem:[%s4 + $0x80] sm:$0xff] %vm1186, %v1147
  %1204 = vst.msk [vmem:[%s4 + $0x88] sm:$0xff] %vm1186, %v1149
  %1205 = vst.msk [vmem:[%s4 + $0x90] sm:$0xff] %vm1186, %v1152
  %1206 = vst.msk [vmem:[%s4 + $0x98] sm:$0xff] %vm1186, %v1154
  %1207 = vst.msk [vmem:[%s4 + $0xa0] sm:$0xff] %vm1186, %v1157
  %1208 = vst.msk [vmem:[%s4 + $0xa8] sm:$0xff] %vm1186, %v1159
  %1209 = vst.msk [vmem:[%s4 + $0xb0] sm:$0xff] %vm1186, %v1162
  %1210 = vst.msk [vmem:[%s4 + $0xb8] sm:$0xff] %vm1186, %v1164
  %1211 = vst.msk [vmem:[%s4 + $0xc0] sm:$0xff] %vm1186, %v1167
  %1212 = vst.msk [vmem:[%s4 + $0xc8] sm:$0xff] %vm1186, %v1169
  %1213 = vst.msk [vmem:[%s4 + $0xd0] sm:$0xff] %vm1186, %v1172
  %1214 = vst.msk [vmem:[%s4 + $0xd8] sm:$0xff] %vm1186, %v1174
  %1215 = vst.msk [vmem:[%s4 + $0xe0] sm:$0xff] %vm1186, %v1177
  %1216 = vst.msk [vmem:[%s4 + $0xe8] sm:$0xff] %vm1186, %v1179
  %1217 = vst.msk [vmem:[%s4 + $0xf0] sm:$0xff] %vm1186, %v1182
  %1218 = vst.msk [vmem:[%s4 + $0xf8] sm:$0xff] %vm1186, %v1184
  // Predicated region
  $region18: #{tpu_custom_call.1} parent=0 // pred_check
    _
  $region19: #{tpu_custom_call.1} parent=0 // pred_check_branch
    %1220 = sbr.rel (0) target = $region21
  $region20: #{tpu_custom_call.1} parent=0 // pred_region
    _
  $region21: #{tpu_custom_call.1} parent=0 // pred_fallthru
    _
  // Predicated region
  $region22: #{tpu_custom_call.1} parent=0 // pred_check
    _
  $region23: #{tpu_custom_call.1} parent=0 // pred_check_branch
    %1222 = sbr.rel (0) target = $region25
  $region24: #{tpu_custom_call.1} parent=0 // pred_region
    _
  $region25: #{tpu_custom_call.1} parent=0 // pred_fallthru
    _

</llo_original>
